<compile_context>
chip_gen: v5e
topology: v5e:2x2
jax: 0.10.0
libtpu: 0.0.40
codegen_flags: <defaults>
</compile_context>

<pallas_src>
import functools

import jax
import jax.numpy as jnp
from jax import lax
from jax.experimental import pallas as pl
from jax.experimental.pallas import tpu as pltpu

EPS = 1e-5


def _cond_norm_kernel(x_ref, gamma_ref, beta_ref, o_ref,
                      sum_ref, sq_ref, scale_ref, shift_ref, *cache_refs,
                      inv_n, use_cache, eps):
    # x_ref: (B, Cb, HWb) native dtype   gamma/beta: (B, Cb, 1) f32
    # o_ref: (B, Cb, HWb) native dtype
    # sum/sq: (1, Cb, 1) f32   scale/shift: (B, Cb, 1) f32
    # cache_refs[0] (optional): (n_hw, B, Cb, HWb) native dtype
    phase = pl.program_id(1)
    hw = pl.program_id(2)

    @pl.when((phase == 0) & (hw == 0))
    def _init():
        sum_ref[...] = jnp.zeros_like(sum_ref)
        sq_ref[...] = jnp.zeros_like(sq_ref)

    @pl.when(phase == 0)
    def _stats():
        xt = x_ref[...]                                   # native dtype tile
        x = xt.astype(jnp.float32)
        s = jnp.sum(x, axis=2, keepdims=True)             # (B, Cb, 1)
        s2 = jnp.sum(x * x, axis=2, keepdims=True)        # (B, Cb, 1)
        sum_ref[...] += jnp.sum(s, axis=0, keepdims=True)     # (1, Cb, 1)
        sq_ref[...] += jnp.sum(s2, axis=0, keepdims=True)
        if use_cache:
            cache_refs[0][hw] = xt                        # VMEM slab cache

    @pl.when((phase == 1) & (hw == 0))
    def _finalize():
        mean = sum_ref[...] * inv_n                       # (1, Cb, 1)
        # One-pass biased variance (train-mode BN); f32 accumulation.
        var = sq_ref[...] * inv_n - mean * mean
        inv_std = lax.rsqrt(var + eps)
        a = gamma_ref[...] * inv_std                      # (B, Cb, 1)
        scale_ref[...] = a
        shift_ref[...] = beta_ref[...] - mean * a

    @pl.when(phase == 1)
    def _apply():
        if use_cache:
            xv = cache_refs[0][hw].astype(jnp.float32)
        else:
            xv = x_ref[...].astype(jnp.float32)
        # Folded affine: one mul + one add per element, pure lane broadcast.
        o_ref[...] = (xv * scale_ref[...] + shift_ref[...]).astype(o_ref.dtype)


def _divisors(n):
    ds = set()
    i = 1
    while i * i <= n:
        if n % i == 0:
            ds.add(i)
            ds.add(n // i)
        i += 1
    return sorted(ds)


def _vmem_capacity_bytes():
    try:
        return int(pltpu.get_tpu_info().vmem_capacity_bytes)
    except Exception:
        return 128 * 1024 * 1024  # v5e/v6e default; v7x query should succeed


def _pick_blocks(B, C, HW, dtype_bytes, vmem_budget):
    """Choose (c_blk, hw_blk, use_cache) under a generation-aware VMEM budget."""
    sub = max(8, 32 // dtype_bytes)          # sublane packing: f32->8, bf16->16
    min_hw = 128 if HW % 128 == 0 else HW

    # Channel-block candidates (must divide C; multiple of `sub` or full C).
    if C % sub == 0:
        c_divs = sorted([d for d in _divisors(C) if d % sub == 0], reverse=True)
    else:
        c_divs = [C]
    # Prefer >= 2 channel blocks when C allows: the "parallel" channel axis
    # then shards across v7x's two TensorCores (harmless on single-TC chips).
    multi = [d for d in c_divs if d < C]
    c_pref = (multi + [C]) if multi else [C]

    # hw-block candidates (must divide HW; multiple of 128 or full HW).
    if HW % 128 == 0:
        hw_divs = sorted([d for d in _divisors(HW) if d % 128 == 0], reverse=True)
    else:
        hw_divs = [HW]

    def tile_bytes(cb, hb):
        return B * cb * hb * dtype_bytes

    # 1) c_blk: largest preferred block whose full (B, c_blk, HW) slab can be
    #    cached in VMEM next to the double-buffered streaming tiles; otherwise
    #    the largest one whose streaming tiles fit at all.
    c_blk, use_cache = None, False
    for cb in c_pref:
        slab = B * cb * HW * dtype_bytes
        if slab + 4 * tile_bytes(cb, min_hw) <= vmem_budget:
            c_blk, use_cache = cb, True
            break
    if c_blk is None:
        for cb in c_pref:
            if 4 * tile_bytes(cb, min_hw) <= vmem_budget:
                c_blk, use_cache = cb, False
                break
    if c_blk is None:
        # TODO(synk): shapes this large also need a batch split; pick the
        # smallest channel block and let the caller's vmem_limit surface it.
        c_blk, use_cache = c_pref[-1], False

    # 2) hw_blk: largest 128-multiple divisor of HW whose streaming buffers
    #    (+ cache, if used) stay inside the budget.
    cache_bytes = B * c_blk * HW * dtype_bytes if use_cache else 0
    hw_blk = min_hw
    for hb in hw_divs:
        if cache_bytes + 4 * tile_bytes(c_blk, hb) <= vmem_budget:
            hw_blk = hb
            break
    return c_blk, hw_blk, use_cache


def conditional_norm(x, label, weight, bias, eps=EPS):
    """BigGAN ConditionalNorm forward.

    x: (B, C, H, W) any float dtype, label: (B, n_cond), weight: (2C, n_cond)
    (PyTorch Linear layout), bias: (2C,).  Returns (B, C, H, W) in x.dtype.
    """
    B, C, H, W = x.shape
    HW = H * W
    x3 = x.reshape(B, C, HW)                              # native dtype, no cast
    dtype_bytes = jnp.dtype(x.dtype).itemsize

    # Tiny Linear on the label, hoisted out of the sequential grid loop.
    embed = (label.astype(jnp.float32) @ weight.astype(jnp.float32).T
             + bias.astype(jnp.float32))
    gamma = embed[:, :C].reshape(B, C, 1)                 # channel -> sublanes
    beta = embed[:, C:].reshape(B, C, 1)

    cap = _vmem_capacity_bytes()
    budget = int(0.70 * cap)                              # generation-aware
    c_blk, hw_blk, use_cache = _pick_blocks(B, C, HW, dtype_bytes, budget)
    n_hw = HW // hw_blk
    grid = (C // c_blk, 2, n_hw)

    tile_bytes = B * c_blk * hw_blk * dtype_bytes
    cache_bytes = B * c_blk * HW * dtype_bytes if use_cache else 0
    need = cache_bytes + 4 * tile_bytes + 16 * B * c_blk * 4
    vmem_limit = int(min(0.85 * cap, max(need + (8 << 20), 32 << 20)))

    kernel = functools.partial(_cond_norm_kernel, inv_n=1.0 / float(B * HW),
                               use_cache=use_cache, eps=float(eps))

    scratch = [
        pltpu.VMEM((1, c_blk, 1), jnp.float32),   # per-channel sum
        pltpu.VMEM((1, c_blk, 1), jnp.float32),   # per-channel sum(x^2)
        pltpu.VMEM((B, c_blk, 1), jnp.float32),   # folded scale (gamma/std)
        pltpu.VMEM((B, c_blk, 1), jnp.float32),   # folded shift
    ]
    if use_cache:
        scratch.append(pltpu.VMEM((n_hw, B, c_blk, hw_blk), x.dtype))

    if use_cache:
        # Phase 1 pins x to the last phase-0 block -> no second HBM read.
        x_map = lambda c, p, h: (0, c, h * (1 - p) + (n_hw - 1) * p)
    else:
        x_map = lambda c, p, h: (0, c, h)

    out3 = pl.pallas_call(
        kernel,
        out_shape=jax.ShapeDtypeStruct((B, C, HW), x.dtype),
        grid_spec=pltpu.PrefetchScalarGridSpec(
            num_scalar_prefetch=0,
            grid=grid,
            in_specs=[
                pl.BlockSpec((B, c_blk, hw_blk), x_map),
                pl.BlockSpec((B, c_blk, 1), lambda c, p, h: (0, c, 0)),
                pl.BlockSpec((B, c_blk, 1), lambda c, p, h: (0, c, 0)),
            ],
            # h*p keeps the output block pinned to (0, c, 0) during the stats
            # phase so nothing is flushed until phase 1 writes real data.
            out_specs=pl.BlockSpec((B, c_blk, hw_blk),
                                   lambda c, p, h: (0, c, h * p)),
            scratch_shapes=scratch,
        ),
        compiler_params=pltpu.CompilerParams(
            dimension_semantics=("parallel", "arbitrary", "arbitrary"),
            vmem_limit_bytes=vmem_limit,
        ),
    )(x3, gamma, beta)

    return out3.reshape(B, C, H, W)


def _reference(x, label, weight, bias):
    # Pure-JAX reference matching the PyTorch module (train-mode BN).
    xf = x.astype(jnp.float32)
    mean = jnp.mean(xf, axis=(0, 2, 3), keepdims=True)
    var = jnp.mean((xf - mean) ** 2, axis=(0, 2, 3), keepdims=True)
    x_norm = (xf - mean) / jnp.sqrt(var + EPS)
    embed = label.astype(jnp.float32) @ weight.astype(jnp.float32).T + bias
    C = x.shape[1]
    gamma = embed[:, :C][:, :, None, None]
    beta = embed[:, C:][:, :, None, None]
    return (gamma * x_norm + beta).astype(x.dtype)


if __name__ == "__main__":
    key = jax.random.PRNGKey(0)
    B, C, H, W = 2, 4, 16, 16
    n_condition = 8

    k1, k2, k3, k4 = jax.random.split(key, 4)
    x = jax.random.normal(k1, (B, C, H, W), dtype=jnp.float32)
    label = jax.random.normal(k2, (B, n_condition), dtype=jnp.float32)

    # nn.Linear(n_condition, 2*C) parameters; mimic init (cols [C:] zeroed).
    weight = jax.random.normal(k3, (2 * C, n_condition), dtype=jnp.float32) * 0.1
    if n_condition > C:
        weight = weight.at[:, C:].set(0.0)
    bias = jax.random.normal(k4, (2 * C,), dtype=jnp.float32) * 0.1

    out = conditional_norm(x, label, weight, bias)
    out = jax.block_until_ready(out)

    ref = _reference(x, label, weight, bias)
    assert out.shape == (B, C, H, W)
    assert out.dtype == x.dtype
    assert jnp.allclose(out, ref, atol=1e-4, rtol=1e-4), "mismatch vs reference"

    print("KERNEL_OK")
</pallas_src>

<mosaic_0001>
module attributes {stable_mosaic.version = 11 : i64} {
  func.func @_cond_norm_kernel(%arg0: i32, %arg1: i32, %arg2: i32, %arg3: memref<2x4x256xf32, #tpu.memory_space<vmem>>, %arg4: memref<2x4x1xf32, #tpu.memory_space<vmem>>, %arg5: memref<2x4x1xf32, #tpu.memory_space<vmem>>, %arg6: memref<2x4x256xf32, #tpu.memory_space<vmem>>, %arg7: memref<1x4x1xf32, #tpu.memory_space<vmem>>, %arg8: memref<1x4x1xf32, #tpu.memory_space<vmem>>, %arg9: memref<2x4x1xf32, #tpu.memory_space<vmem>>, %arg10: memref<2x4x1xf32, #tpu.memory_space<vmem>>, %arg11: memref<1x2x4x256xf32, #tpu.memory_space<vmem>>) attributes {dimension_semantics = [#tpu.dimension_semantics<parallel>, #tpu.dimension_semantics<arbitrary>, #tpu.dimension_semantics<arbitrary>], iteration_bounds = array<i64: 1, 2, 1>, scalar_prefetch = 0 : i64, scratch_operands = 5 : i64, tpu.core_type = #tpu.core_type<tc>, window_params = [{transform_indices = @transform_0, window_bounds = array<i64: 2, 4, 256>}, {transform_indices = @transform_1, window_bounds = array<i64: 2, 4, 1>}, {transform_indices = @transform_2, window_bounds = array<i64: 2, 4, 1>}, {transform_indices = @transform_3, window_bounds = array<i64: 2, 4, 256>}]} {
    %c0_i32 = arith.constant 0 : i32
    %0 = arith.cmpi eq, %arg1, %c0_i32 : i32
    %c0_i32_0 = arith.constant 0 : i32
    %1 = arith.cmpi eq, %arg2, %c0_i32_0 : i32
    %2 = arith.andi %0, %1 : i1
    %3 = arith.extui %2 : i1 to i32
    %c0_i32_1 = arith.constant 0 : i32
    %4 = arith.cmpi ne, %3, %c0_i32_1 : i32
    scf.if %4 {
      %cst = arith.constant 0.000000e+00 : f32
      %16 = vector.broadcast %cst : f32 to vector<1x4x1xf32>
      %c0 = arith.constant 0 : index
      %c0_8 = arith.constant 0 : index
      %c0_9 = arith.constant 0 : index
      %17 = vector.load %arg7[%c0, %c0_8, %c0_9] : memref<1x4x1xf32, #tpu.memory_space<vmem>>, vector<1x4x1xf32>
      tpu.vector_store %arg7[%c0, %c0_8, %c0_9], %16 {strides = array<i32>} : memref<1x4x1xf32, #tpu.memory_space<vmem>>, vector<1x4x1xf32>,
      %cst_10 = arith.constant 0.000000e+00 : f32
      %18 = vector.broadcast %cst_10 : f32 to vector<1x4x1xf32>
      %c0_11 = arith.constant 0 : index
      %c0_12 = arith.constant 0 : index
      %c0_13 = arith.constant 0 : index
      %19 = vector.load %arg8[%c0_11, %c0_12, %c0_13] : memref<1x4x1xf32, #tpu.memory_space<vmem>>, vector<1x4x1xf32>
      tpu.vector_store %arg8[%c0_11, %c0_12, %c0_13], %18 {strides = array<i32>} : memref<1x4x1xf32, #tpu.memory_space<vmem>>, vector<1x4x1xf32>,
    } else {
    }
    %c0_i32_2 = arith.constant 0 : i32
    %5 = arith.cmpi eq, %arg1, %c0_i32_2 : i32
    %6 = arith.extui %5 : i1 to i32
    %c0_i32_3 = arith.constant 0 : i32
    %7 = arith.cmpi ne, %6, %c0_i32_3 : i32
    scf.if %7 {
      %c0 = arith.constant 0 : index
      %c0_8 = arith.constant 0 : index
      %c0_9 = arith.constant 0 : index
      %16 = vector.load %arg3[%c0, %c0_8, %c0_9] : memref<2x4x256xf32, #tpu.memory_space<vmem>>, vector<2x4x256xf32>
      %cst = arith.constant dense<0.000000e+00> : vector<2x4xf32>
      %17 = vector.multi_reduction <add>, %16, %cst [2] : vector<2x4x256xf32> to vector<2x4xf32>
      %18 = vector.shape_cast %17 : vector<2x4xf32> to vector<2x4x1xf32>
      %19 = arith.mulf %16, %16 : vector<2x4x256xf32>
      %cst_10 = arith.constant dense<0.000000e+00> : vector<2x4xf32>
      %20 = vector.multi_reduction <add>, %19, %cst_10 [2] : vector<2x4x256xf32> to vector<2x4xf32>
      %21 = vector.shape_cast %20 : vector<2x4xf32> to vector<2x4x1xf32>
      %c0_11 = arith.constant 0 : index
      %c0_12 = arith.constant 0 : index
      %c0_13 = arith.constant 0 : index
      %22 = vector.load %arg7[%c0_11, %c0_12, %c0_13] : memref<1x4x1xf32, #tpu.memory_space<vmem>>, vector<1x4x1xf32>
      %cst_14 = arith.constant dense<0.000000e+00> : vector<4x1xf32>
      %23 = vector.multi_reduction <add>, %18, %cst_14 [0] : vector<2x4x1xf32> to vector<4x1xf32>
      %24 = vector.shape_cast %23 : vector<4x1xf32> to vector<1x4x1xf32>
      %25 = arith.addf %22, %24 : vector<1x4x1xf32>
      %c0_15 = arith.constant 0 : index
      %c0_16 = arith.constant 0 : index
      %c0_17 = arith.constant 0 : index
      %26 = vector.load %arg7[%c0_15, %c0_16, %c0_17] : memref<1x4x1xf32, #tpu.memory_space<vmem>>, vector<1x4x1xf32>
      tpu.vector_store %arg7[%c0_15, %c0_16, %c0_17], %25 {strides = array<i32>} : memref<1x4x1xf32, #tpu.memory_space<vmem>>, vector<1x4x1xf32>,
      %c0_18 = arith.constant 0 : index
      %c0_19 = arith.constant 0 : index
      %c0_20 = arith.constant 0 : index
      %27 = vector.load %arg8[%c0_18, %c0_19, %c0_20] : memref<1x4x1xf32, #tpu.memory_space<vmem>>, vector<1x4x1xf32>
      %cst_21 = arith.constant dense<0.000000e+00> : vector<4x1xf32>
      %28 = vector.multi_reduction <add>, %21, %cst_21 [0] : vector<2x4x1xf32> to vector<4x1xf32>
      %29 = vector.shape_cast %28 : vector<4x1xf32> to vector<1x4x1xf32>
      %30 = arith.addf %27, %29 : vector<1x4x1xf32>
      %c0_22 = arith.constant 0 : index
      %c0_23 = arith.constant 0 : index
      %c0_24 = arith.constant 0 : index
      %31 = vector.load %arg8[%c0_22, %c0_23, %c0_24] : memref<1x4x1xf32, #tpu.memory_space<vmem>>, vector<1x4x1xf32>
      tpu.vector_store %arg8[%c0_22, %c0_23, %c0_24], %30 {strides = array<i32>} : memref<1x4x1xf32, #tpu.memory_space<vmem>>, vector<1x4x1xf32>,
      %32 = arith.index_cast %arg2 : i32 to index
      %c0_25 = arith.constant 0 : index
      %c0_26 = arith.constant 0 : index
      %c0_27 = arith.constant 0 : index
      %33 = vector.load %arg11[%32, %c0_25, %c0_26, %c0_27] : memref<1x2x4x256xf32, #tpu.memory_space<vmem>>, vector<1x2x4x256xf32>
      %34 = vector.shape_cast %33 : vector<1x2x4x256xf32> to vector<2x4x256xf32>
      %35 = vector.shape_cast %16 : vector<2x4x256xf32> to vector<1x2x4x256xf32>
      tpu.vector_store %arg11[%32, %c0_25, %c0_26, %c0_27], %35 {strides = array<i32>} : memref<1x2x4x256xf32, #tpu.memory_space<vmem>>, vector<1x2x4x256xf32>,
    } else {
    }
    %c1_i32 = arith.constant 1 : i32
    %8 = arith.cmpi eq, %arg1, %c1_i32 : i32
    %c0_i32_4 = arith.constant 0 : i32
    %9 = arith.cmpi eq, %arg2, %c0_i32_4 : i32
    %10 = arith.andi %8, %9 : i1
    %11 = arith.extui %10 : i1 to i32
    %c0_i32_5 = arith.constant 0 : i32
    %12 = arith.cmpi ne, %11, %c0_i32_5 : i32
    scf.if %12 {
      %c0 = arith.constant 0 : index
      %c0_8 = arith.constant 0 : index
      %c0_9 = arith.constant 0 : index
      %16 = vector.load %arg7[%c0, %c0_8, %c0_9] : memref<1x4x1xf32, #tpu.memory_space<vmem>>, vector<1x4x1xf32>
      %cst = arith.constant 0.001953125 : f32
      %17 = vector.broadcast %cst : f32 to vector<1x4x1xf32>
      %18 = arith.mulf %16, %17 : vector<1x4x1xf32>
      %c0_10 = arith.constant 0 : index
      %c0_11 = arith.constant 0 : index
      %c0_12 = arith.constant 0 : index
      %19 = vector.load %arg8[%c0_10, %c0_11, %c0_12] : memref<1x4x1xf32, #tpu.memory_space<vmem>>, vector<1x4x1xf32>
      %cst_13 = arith.constant 0.001953125 : f32
      %20 = vector.broadcast %cst_13 : f32 to vector<1x4x1xf32>
      %21 = arith.mulf %19, %20 : vector<1x4x1xf32>
      %22 = arith.mulf %18, %18 : vector<1x4x1xf32>
      %23 = arith.subf %21, %22 : vector<1x4x1xf32>
      %cst_14 = arith.constant 9.99999974E-6 : f32
      %24 = vector.broadcast %cst_14 : f32 to vector<1x4x1xf32>
      %25 = arith.addf %23, %24 : vector<1x4x1xf32>
      %26 = math.rsqrt %25 : vector<1x4x1xf32>
      %c0_15 = arith.constant 0 : index
      %c0_16 = arith.constant 0 : index
      %c0_17 = arith.constant 0 : index
      %27 = vector.load %arg4[%c0_15, %c0_16, %c0_17] : memref<2x4x1xf32, #tpu.memory_space<vmem>>, vector<2x4x1xf32>
      %28 = vector.broadcast %26 : vector<1x4x1xf32> to vector<2x4x1xf32>
      %29 = arith.mulf %27, %28 : vector<2x4x1xf32>
      %c0_18 = arith.constant 0 : index
      %c0_19 = arith.constant 0 : index
      %c0_20 = arith.constant 0 : index
      %30 = vector.load %arg9[%c0_18, %c0_19, %c0_20] : memref<2x4x1xf32, #tpu.memory_space<vmem>>, vector<2x4x1xf32>
      tpu.vector_store %arg9[%c0_18, %c0_19, %c0_20], %29 {strides = array<i32>} : memref<2x4x1xf32, #tpu.memory_space<vmem>>, vector<2x4x1xf32>,
      %c0_21 = arith.constant 0 : index
      %c0_22 = arith.constant 0 : index
      %c0_23 = arith.constant 0 : index
      %31 = vector.load %arg5[%c0_21, %c0_22, %c0_23] : memref<2x4x1xf32, #tpu.memory_space<vmem>>, vector<2x4x1xf32>
      %32 = vector.broadcast %18 : vector<1x4x1xf32> to vector<2x4x1xf32>
      %33 = arith.mulf %32, %29 : vector<2x4x1xf32>
      %34 = arith.subf %31, %33 : vector<2x4x1xf32>
      %c0_24 = arith.constant 0 : index
      %c0_25 = arith.constant 0 : index
      %c0_26 = arith.constant 0 : index
      %35 = vector.load %arg10[%c0_24, %c0_25, %c0_26] : memref<2x4x1xf32, #tpu.memory_space<vmem>>, vector<2x4x1xf32>
      tpu.vector_store %arg10[%c0_24, %c0_25, %c0_26], %34 {strides = array<i32>} : memref<2x4x1xf32, #tpu.memory_space<vmem>>, vector<2x4x1xf32>,
    } else {
    }
    %c1_i32_6 = arith.constant 1 : i32
    %13 = arith.cmpi eq, %arg1, %c1_i32_6 : i32
    %14 = arith.extui %13 : i1 to i32
    %c0_i32_7 = arith.constant 0 : i32
    %15 = arith.cmpi ne, %14, %c0_i32_7 : i32
    scf.if %15 {
      %16 = arith.index_cast %arg2 : i32 to index
      %c0 = arith.constant 0 : index
      %c0_8 = arith.constant 0 : index
      %c0_9 = arith.constant 0 : index
      %17 = vector.load %arg11[%16, %c0, %c0_8, %c0_9] : memref<1x2x4x256xf32, #tpu.memory_space<vmem>>, vector<1x2x4x256xf32>
      %18 = vector.shape_cast %17 : vector<1x2x4x256xf32> to vector<2x4x256xf32>
      %c0_10 = arith.constant 0 : index
      %c0_11 = arith.constant 0 : index
      %c0_12 = arith.constant 0 : index
      %19 = vector.load %arg9[%c0_10, %c0_11, %c0_12] : memref<2x4x1xf32, #tpu.memory_space<vmem>>, vector<2x4x1xf32>
      %20 = vector.broadcast %19 : vector<2x4x1xf32> to vector<2x4x256xf32>
      %21 = arith.mulf %18, %20 : vector<2x4x256xf32>
      %c0_13 = arith.constant 0 : index
      %c0_14 = arith.constant 0 : index
      %c0_15 = arith.constant 0 : index
      %22 = vector.load %arg10[%c0_13, %c0_14, %c0_15] : memref<2x4x1xf32, #tpu.memory_space<vmem>>, vector<2x4x1xf32>
      %23 = vector.broadcast %22 : vector<2x4x1xf32> to vector<2x4x256xf32>
      %24 = arith.addf %21, %23 : vector<2x4x256xf32>
      %c0_16 = arith.constant 0 : index
      %c0_17 = arith.constant 0 : index
      %c0_18 = arith.constant 0 : index
      %25 = vector.load %arg6[%c0_16, %c0_17, %c0_18] : memref<2x4x256xf32, #tpu.memory_space<vmem>>, vector<2x4x256xf32>
      tpu.vector_store %arg6[%c0_16, %c0_17, %c0_18], %24 {strides = array<i32>} : memref<2x4x256xf32, #tpu.memory_space<vmem>>, vector<2x4x256xf32>,
    } else {
    }
    return
  }
  func.func @transform_0(%arg0: i32, %arg1: i32, %arg2: i32) -> (i32, i32, i32) {
    %c1_i32 = arith.constant 1 : i32
    %0 = arith.subi %c1_i32, %arg1 : i32
    %1 = arith.muli %arg2, %0 : i32
    %c0_i32 = arith.constant 0 : i32
    %2 = arith.muli %c0_i32, %arg1 : i32
    %3 = arith.addi %1, %2 : i32
    %c0_i32_0 = arith.constant 0 : i32
    %c0_i32_1 = arith.constant 0 : i32
    return %c0_i32_0, %arg0, %3 : i32, i32, i32
  }
  func.func @transform_1(%arg0: i32, %arg1: i32, %arg2: i32) -> (i32, i32, i32) {
    %c0_i32 = arith.constant 0 : i32
    %c0_i32_0 = arith.constant 0 : i32
    %c0_i32_1 = arith.constant 0 : i32
    return %c0_i32, %arg0, %c0_i32_0 : i32, i32, i32
  }
  func.func @transform_2(%arg0: i32, %arg1: i32, %arg2: i32) -> (i32, i32, i32) {
    %c0_i32 = arith.constant 0 : i32
    %c0_i32_0 = arith.constant 0 : i32
    %c0_i32_1 = arith.constant 0 : i32
    return %c0_i32, %arg0, %c0_i32_0 : i32, i32, i32
  }
  func.func @transform_3(%arg0: i32, %arg1: i32, %arg2: i32) -> (i32, i32, i32) {
    %0 = arith.muli %arg2, %arg1 : i32
    %c0_i32 = arith.constant 0 : i32
    %c0_i32_0 = arith.constant 0 : i32
    return %c0_i32, %arg0, %0 : i32, i32, i32
  }
}

</mosaic_0001>

<llo_original>
// kernel: tpu_custom_call.1
$region0: #{tpu_custom_call.1}
  #allocation0 [shape = 'u32[]', space=smem, size = 0x4, offset = 0x4, fixed_abs, tag = 'smem constant byte address 0x4 - core index']
  #allocation1 [shape = 'u32[72,128]{1,0:T(1,128)}', space=vmem, size = 0x9000, scoped, tag = 'internal scratch']
  #allocation2 [shape = 'f32[1,4,1]{2,1,0:T(4,128)}', space=vmem, size = 0x800, scoped, tag = 'scratch operand']
  #allocation3 [shape = 'f32[1,4,1]{2,1,0:T(4,128)}', space=vmem, size = 0x800, scoped, tag = 'scratch operand']
  #allocation4 [shape = 'f32[2,4,1]{2,1,0:T(4,128)}', space=vmem, size = 0x1000, scoped, tag = 'scratch operand']
  #allocation5 [shape = 'f32[2,4,1]{2,1,0:T(4,128)}', space=vmem, size = 0x1000, scoped, tag = 'scratch operand']
  #allocation6 [shape = 'f32[1,2,4,256]{3,2,1,0:T(4,128)}', space=vmem, size = 0x2000, scoped, tag = 'scratch operand']
  %s0 = inlined_call_operand.vmem [shape: f32[2,4,256], index: 0, kind: input, shape index: {}]
  %s1 = inlined_call_operand.vmem [shape: f32[2,4,1], index: 1, kind: input, shape index: {}]
  %s2 = inlined_call_operand.vmem [shape: f32[2,4,1], index: 2, kind: input, shape index: {}]
  %s3 = inlined_call_operand.hbm [shape: f32[2,4,256], index: 3, kind: output, shape index: {}]
  %s4 = sld [smem:[#allocation0]]
  $region61: #{tpu_custom_call.1} parent=0
    _
  %s6 = ssub.s32 1, %s4
  %s7 = scalar_select 0, %s6, %s4
  $region1: #{tpu_custom_call.1} parent=0
    #allocation7 [shape = 'u8[16384]{0}', space=vmem, size = 0x4000, scoped, tag = 'output window, operand 0']
    #allocation8 [shape = 's32[2]{0}', space=sflag, size = 0x8, scoped, tag = 'scoped memory for tpu_custom_call.1']
    %8 = vsyncpa [#allocation8], 0
    %s9 = scalar_lea.sflag [#allocation8], 1
    %10 = vsyncpa %s9, 0
    loop: start=0, step=1, limit=4
    $region2: #{tpu_custom_call.1} parent=1 // loop_pre_header
      _
    $region3: #{tpu_custom_call.1} parent=1 // loop_header
      %s12 = sphi 0, %s16
      %p13 = scmp.ge.s32.totalorder %s12, 4
      %s19 = sphi 0, %s38
      %s20 = sphi 0, %s34
      %s21 = sphi 0, %s30
      %s22 = sphi 0, %s19
      %s23 = sphi 0, %s20
      %s24 = sphi 0, %s21
      %s25 = sphi 0, %s22
      %s26 = sphi 0, %s23
      %s27 = sphi 0, %s24
      %s47 = sphi 0, %s49
      %s50 = sphi 0, %s47
      %s51 = sphi 0, %s50
      %s67 = sphi 0, %s51
      %s73 = sphi 0, %s75
      %s76 = sphi 0, %s73
      %s77 = sphi 0, %s76
      %s93 = sphi 0, %s77
      %s99 = sphi 0, %s101
      %s102 = sphi 0, %s99
      %s103 = sphi 0, %s102
      %s119 = sphi 0, %s103
      %s129 = sphi 0, %s131
      %s132 = sphi 0, %s129
      %s133 = sphi 0, %s132
      %s149 = sphi 0, %s133
    $region4: #{tpu_custom_call.1} parent=1 // loop_header_branch
      %15 = sbr.rel (%p13) target = $region8
    $region5: #{tpu_custom_call.1} parent=1 // loop_body
      %s17 = ssub.s32 %s12, 1
      %s18 = ssub.s32 %s12, 2
      %s28 = sadd.s32 1, %s21
      %p29 = scmp.ge.s32.totalorder %s28, 1
      %s30 = scalar_select %p29, 0, %s28
      %s31 = sadd.s32 1, %s20
      %s32 = scalar_select %p29, %s31, %s20
      %p33 = scmp.ge.s32.totalorder %s32, 2
      %s34 = scalar_select %p33, 0, %s32
      %s35 = sadd.s32 1, %s19
      %s36 = scalar_select %p33, %s35, %s19
      %p37 = scmp.ge.s32.totalorder %s36, 1
      %s38 = scalar_select %p37, 0, %s36
      %s39 = ssub.s32 1, %s20
      %s40 = smul.u32 %s21, %s39
      %s41 = ssub.s32 1, %s34
      %s42 = smul.u32 %s30, %s41
      %s43 = ssub.s32 %s19, %s38
      %s44 = ssub.s32 %s40, %s42
      %s45 = sor.u32 %s43, %s44
      %p46 = scmp.eq.s32.totalorder %s45, 0
      %s48 = sadd.s32 %s47, 1
      %s49 = scalar_select %p46, %s47, %s48
      %p52 = pneg %p46
      %p53 = scmp.eq.s32.totalorder %s12, 1
      %p54 = por %p52, %p53
      %p55 = scmp.ne.s32.totalorder %s47, %s50
      %p56 = scmp.eq.s32.totalorder %s12, 0
      %p57 = por %p55, %p56
      %p58 = scmp.ne.s32.totalorder %s47, %s50
      %p59 = scmp.eq.s32.totalorder %s17, 1
      %p60 = por %p58, %p59
      %p61 = scmp.ne.s32.totalorder %s50, %s51
      %p62 = scmp.eq.s32.totalorder %s17, 0
      %p63 = por %p61, %p62
      %p64 = scmp.ne.s32.totalorder %s50, %s51
      %p65 = scmp.eq.s32.totalorder %s18, 1
      %p66 = por %p64, %p65
      %p68 = scmp.ne.s32.totalorder %s51, %s67
      %p69 = scmp.eq.s32.totalorder %s18, 0
      %p70 = por %p68, %p69
      %s71 = ssub.s32 %s19, %s38
      %p72 = scmp.eq.s32.totalorder %s71, 0
      %s74 = sadd.s32 %s73, 1
      %s75 = scalar_select %p72, %s73, %s74
      %p78 = pneg %p72
      %p79 = scmp.eq.s32.totalorder %s12, 1
      %p80 = por %p78, %p79
      %p81 = scmp.ne.s32.totalorder %s73, %s76
      %p82 = scmp.eq.s32.totalorder %s12, 0
      %p83 = por %p81, %p82
      %p84 = scmp.ne.s32.totalorder %s73, %s76
      %p85 = scmp.eq.s32.totalorder %s17, 1
      %p86 = por %p84, %p85
      %p87 = scmp.ne.s32.totalorder %s76, %s77
      %p88 = scmp.eq.s32.totalorder %s17, 0
      %p89 = por %p87, %p88
      %p90 = scmp.ne.s32.totalorder %s76, %s77
      %p91 = scmp.eq.s32.totalorder %s18, 1
      %p92 = por %p90, %p91
      %p94 = scmp.ne.s32.totalorder %s77, %s93
      %p95 = scmp.eq.s32.totalorder %s18, 0
      %p96 = por %p94, %p95
      %s97 = ssub.s32 %s19, %s38
      %p98 = scmp.eq.s32.totalorder %s97, 0
      %s100 = sadd.s32 %s99, 1
      %s101 = scalar_select %p98, %s99, %s100
      %p104 = pneg %p98
      %p105 = scmp.eq.s32.totalorder %s12, 1
      %p106 = por %p104, %p105
      %p107 = scmp.ne.s32.totalorder %s99, %s102
      %p108 = scmp.eq.s32.totalorder %s12, 0
      %p109 = por %p107, %p108
      %p110 = scmp.ne.s32.totalorder %s99, %s102
      %p111 = scmp.eq.s32.totalorder %s17, 1
      %p112 = por %p110, %p111
      %p113 = scmp.ne.s32.totalorder %s102, %s103
      %p114 = scmp.eq.s32.totalorder %s17, 0
      %p115 = por %p113, %p114
      %p116 = scmp.ne.s32.totalorder %s102, %s103
      %p117 = scmp.eq.s32.totalorder %s18, 1
      %p118 = por %p116, %p117
      %p120 = scmp.ne.s32.totalorder %s103, %s119
      %p121 = scmp.eq.s32.totalorder %s18, 0
      %p122 = por %p120, %p121
      %s123 = smul.u32 %s21, %s20
      %s124 = smul.u32 %s30, %s34
      %s125 = ssub.s32 %s19, %s38
      %s126 = ssub.s32 %s123, %s124
      %s127 = sor.u32 %s125, %s126
      %p128 = scmp.eq.s32.totalorder %s127, 0
      %s130 = sadd.s32 %s129, 1
      %s131 = scalar_select %p128, %s129, %s130
      %p134 = pneg %p128
      %p135 = scmp.eq.s32.totalorder %s12, 1
      %p136 = por %p134, %p135
      %p137 = scmp.ne.s32.totalorder %s129, %s132
      %p138 = scmp.eq.s32.totalorder %s12, 0
      %p139 = por %p137, %p138
      %p140 = scmp.ne.s32.totalorder %s129, %s132
      %p141 = scmp.eq.s32.totalorder %s17, 1
      %p142 = por %p140, %p141
      %p143 = scmp.ne.s32.totalorder %s132, %s133
      %p144 = scmp.eq.s32.totalorder %s17, 0
      %p145 = por %p143, %p144
      %p146 = scmp.ne.s32.totalorder %s132, %s133
      %p147 = scmp.eq.s32.totalorder %s18, 1
      %p148 = por %p146, %p147
      %p150 = scmp.ne.s32.totalorder %s133, %s149
      %p151 = scmp.eq.s32.totalorder %s18, 0
      %p152 = por %p150, %p151
      %p153 = scmp.le.s32.totalorder 1, %s12
      %p154 = scmp.lt.s32.totalorder %s12, 3
      %p155 = pnand %p153, %p154
      %p156 = pneg %p155
      // Predicated region
      $region9: #{tpu_custom_call.1} parent=5 // pred_check
        _
      $region10: #{tpu_custom_call.1} parent=5 // pred_check_branch
        %158 = sbr.rel (%p155) target = $region12
      $region11: #{tpu_custom_call.1} parent=5 // pred_region
        %s159 = ssub.s32 %s12, 1
        // Predicated region
        $region13: #{tpu_custom_call.1} parent=11 // pred_check
          %p160 = pneg %p89
        $region14: #{tpu_custom_call.1} parent=11 // pred_check_branch
          %162 = sbr.rel (%p160) target = $region16
        $region15: #{tpu_custom_call.1} parent=11 // pred_region
          %p163 = scmp.lt.s32.totalorder %s22, 0
          %s164 = scalar_select %p163, %s22, 0
          %s165 = smul.addr %s164, 4
          %s166 = scalar_lea.vmem %s1, %s165
        $region16: #{tpu_custom_call.1} parent=11 // pred_fallthru
          _
        // Predicated region
        $region17: #{tpu_custom_call.1} parent=11 // pred_check
          %p167 = pneg %p115
        $region18: #{tpu_custom_call.1} parent=11 // pred_check_branch
          %169 = sbr.rel (%p167) target = $region20
        $region19: #{tpu_custom_call.1} parent=11 // pred_region
          %p170 = scmp.lt.s32.totalorder %s22, 0
          %s171 = scalar_select %p170, %s22, 0
          %s172 = smul.addr %s171, 4
          %s173 = scalar_lea.vmem %s2, %s172
        $region20: #{tpu_custom_call.1} parent=11 // pred_fallthru
          _
      $region12: #{tpu_custom_call.1} parent=5 // pred_fallthru
        _
      %p174 = scmp.lt.s32.totalorder %s12, 2
      // Predicated region
      $region21: #{tpu_custom_call.1} parent=5 // pred_check
        %p175 = pneg %p174
      $region22: #{tpu_custom_call.1} parent=5 // pred_check_branch
        %177 = sbr.rel (%p175) target = $region24
      $region23: #{tpu_custom_call.1} parent=5 // pred_region
        // Predicated region
        $region25: #{tpu_custom_call.1} parent=23 // pred_check
          %p178 = pneg %p57
        $region26: #{tpu_custom_call.1} parent=23 // pred_check_branch
          %180 = sbr.rel (%p178) target = $region28
        $region27: #{tpu_custom_call.1} parent=23 // pred_region
          %s181 = ssub.s32 1, %s20
          %s182 = smul.u32 %s21, %s181
          %s183 = smul.u32 2, %s182
          %p184 = scmp.lt.s32.totalorder %s19, 0
          %s185 = scalar_select %p184, %s19, 0
          %p186 = scmp.lt.s32.totalorder %s183, 1
          %s187 = scalar_select %p186, %s183, 1
          %s188 = smul.addr %s185, 2
          %s189 = sadd.s32 %s187, %s188
          %s190 = smul.addr %s189, 4
          %s191 = scalar_lea.vmem %s0, %s190
          %s192 = ssub.s32 1, %s20
          %s193 = smul.u32 %s21, %s192
          %s194 = smul.u32 2, %s193
        $region28: #{tpu_custom_call.1} parent=23 // pred_fallthru
          _
      $region24: #{tpu_custom_call.1} parent=5 // pred_fallthru
        _
      %p195 = scmp.le.s32.totalorder 1, %s12
      %p196 = scmp.lt.s32.totalorder %s12, 3
      %p197 = pnand %p195, %p196
      %p198 = pneg %p197
      // Predicated region
      $region29: #{tpu_custom_call.1} parent=5 // pred_check
        _
      $region30: #{tpu_custom_call.1} parent=5 // pred_check_branch
        %200 = sbr.rel (%p197) target = $region32
      $region31: #{tpu_custom_call.1} parent=5 // pred_region
        %s201 = ssub.s32 %s12, 1
        %s202 = ssub.s32 1, %s23
        %s203 = smul.u32 %s24, %s202
        %s204 = smul.u32 2, %s203
        %p205 = scmp.lt.s32.totalorder %s22, 0
        %s206 = scalar_select %p205, %s22, 0
        %p207 = scmp.lt.s32.totalorder %s204, 1
        %s208 = scalar_select %p207, %s204, 1
        %s209 = smul.addr %s206, 2
        %s210 = sadd.s32 %s208, %s209
        %s211 = smul.addr %s210, 4
        %s212 = scalar_lea.vmem %s0, %s211
        %p213 = pneg %p63
        %p214 = pneg %p60
        %p215 = scmp.lt.s32.totalorder %s22, 0
        %s216 = scalar_select %p215, %s22, 0
        %s217 = smul.addr %s216, 4
        %s218 = scalar_lea.vmem %s1, %s217
        %p219 = pneg %p89
        %p220 = pneg %p86
        %p221 = scmp.lt.s32.totalorder %s22, 0
        %s222 = scalar_select %p221, %s22, 0
        %s223 = smul.addr %s222, 4
        %s224 = scalar_lea.vmem %s2, %s223
        %p225 = pneg %p115
        %p226 = pneg %p112
        %p227 = pneg %p145
        %p228 = pneg %p142
        %s229 = sand.u32 %s132, 1
        %s230 = scalar_lea.sflag [#allocation8], %s229
        %s231 = sand.u32 %s132, 1
        %s232 = smul.addr %s231, 16
        %s233 = scalar_lea.vmem [#allocation7], %s232
        %s234 = ssub.s32 1, %s23
        %s235 = smul.u32 %s24, %s234
        %s236 = smul.u32 2, %s235
        %p237 = scmp.lt.s32.totalorder %s22, 0
        %s238 = scalar_select %p237, %s22, 0
        %p239 = scmp.lt.s32.totalorder %s236, 1
        %s240 = scalar_select %p239, %s236, 1
        %s241 = smul.addr %s238, 2
        %s242 = sadd.s32 %s240, %s241
        %s243 = smul.addr %s242, 4
        %s244 = scalar_lea.vmem %s0, %s243
        %s245 = ssub.s32 1, %s23
        %s246 = smul.u32 %s24, %s245
        %s247 = smul.u32 2, %s246
        %p248 = scmp.lt.s32.totalorder %s22, 0
        %s249 = scalar_select %p248, %s22, 0
        %s250 = smul.addr %s249, 4
        %s251 = scalar_lea.vmem %s1, %s250
        %p252 = scmp.lt.s32.totalorder %s22, 0
        %s253 = scalar_select %p252, %s22, 0
        %s254 = smul.addr %s253, 4
        %s255 = scalar_lea.vmem %s2, %s254
        %s256 = smul.u32 %s24, %s23
        %s257 = smul.u32 2, %s256
        %p258 = scmp.eq.s32.totalorder %s23, 0
        %p259 = scmp.eq.s32.totalorder %s24, 0
        %p260 = pnand %p258, %p259
        %p261 = pneg %p260
        // Predicated region
        $region33: #{tpu_custom_call.1} parent=31 // pred_check
          _
        $region34: #{tpu_custom_call.1} parent=31 // pred_check_branch
          %263 = sbr.rel (%p260) target = $region36
        $region35: #{tpu_custom_call.1} parent=31 // pred_region
          %vm264 = vcmask 3072
          %265 = vst.msk [vmem:[#allocation2] sm:$0xf] %vm264, 0.0
          %266 = vst.msk [vmem:[#allocation3] sm:$0xf] %vm264, 0.0
        $region36: #{tpu_custom_call.1} parent=31 // pred_fallthru
          _
        // Predicated region
        $region37: #{tpu_custom_call.1} parent=31 // pred_check
          %p267 = pneg %p258
        $region38: #{tpu_custom_call.1} parent=31 // pred_check_branch
          %269 = sbr.rel (%p267) target = $region40
        $region39: #{tpu_custom_call.1} parent=31 // pred_region
          %v270 = vld [vmem:[%s244] sm:$0xff]
          %v271 = vld [vmem:[%s244 + $0x8] sm:$0xff]
          %274 = vst [vmem:[#allocation1] ss:$2 sm:$0xff] %v270
          %v275 = vld.sshfl [vmem:[#allocation1] sm:$0xff pattern:$0x75316420]
          %v276 = vld.sshfl [vmem:[#allocation1 + $0x8] sm:$0xff pattern:$0x75316420]
          %s277 = scalar_lea.vmem [#allocation1], 16
          %278 = vst [vmem:[%s277] ss:$2 sm:$0xff] %v271
          %v279 = vld.sshfl [vmem:[#allocation1 + $0x10] sm:$0xff pattern:$0x75316420]
          %v280 = vld.sshfl [vmem:[#allocation1 + $0x18] sm:$0xff pattern:$0x75316420]
          %vm285 = vcmask 1043456
          %v286 = vsel %vm285, %v275, 0.0
          %v287 = vsel %vm285, %v276, 0.0
          %v288 = vadd.f32 %v286, %v287
          %289 = vadd.xlane.f32.xlu0 %v288
          %v290 = vpop.xlane.xlu0 %289
          %v291 = vsel %vm285, %v279, 0.0
          %v292 = vsel %vm285, %v280, 0.0
          %v293 = vadd.f32 %v291, %v292
          %294 = vadd.xlane.f32.xlu0 %v293
          %v295 = vpop.xlane.xlu0 %294
          %v296 = vmul.f32 %v270, %v270
          %v297 = vmul.f32 %v271, %v271
          %300 = vst [vmem:[#allocation1] ss:$2 sm:$0xff] %v296
          %v301 = vld.sshfl [vmem:[#allocation1] sm:$0xff pattern:$0x75316420]
          %v302 = vld.sshfl [vmem:[#allocation1 + $0x8] sm:$0xff pattern:$0x75316420]
          %s303 = scalar_lea.vmem [#allocation1], 16
          %304 = vst [vmem:[%s303] ss:$2 sm:$0xff] %v297
          %v305 = vld.sshfl [vmem:[#allocation1 + $0x10] sm:$0xff pattern:$0x75316420]
          %v306 = vld.sshfl [vmem:[#allocation1 + $0x18] sm:$0xff pattern:$0x75316420]
          %v311 = vsel %vm285, %v301, 0.0
          %v312 = vsel %vm285, %v302, 0.0
          %v313 = vadd.f32 %v311, %v312
          %314 = vadd.xlane.f32.xlu0 %v313
          %v315 = vpop.xlane.xlu0 %314
          %v316 = vsel %vm285, %v305, 0.0
          %v317 = vsel %vm285, %v306, 0.0
          %v318 = vadd.f32 %v316, %v317
          %319 = vadd.xlane.f32.xlu0 %v318
          %v320 = vpop.xlane.xlu0 %319
          %v321 = vld [vmem:[#allocation2] sm:$0xf]
          %v322 = vsel %vm285, %v290, 0.0
          %v323 = vsel %vm285, %v295, 0.0
          %v324 = vadd.f32 %v322, %v323
          %v325 = vadd.f32 %v321, %v324
          %vm326 = vcmask 3072
          %327 = vst.msk [vmem:[#allocation2] sm:$0xf] %vm326, %v325
          %v328 = vld [vmem:[#allocation3] sm:$0xf]
          %v329 = vsel %vm285, %v315, 0.0
          %v330 = vsel %vm285, %v320, 0.0
          %v331 = vadd.f32 %v329, %v330
          %v332 = vadd.f32 %v328, %v331
          %333 = vst.msk [vmem:[#allocation3] sm:$0xf] %vm326, %v332
          %s334 = smul.u32 %s24, 4
          %s335 = smul.addr %s334, 4
          %s336 = scalar_lea.vmem [#allocation6], %s335
          %337 = vst [vmem:[%s336] sm:$0xff] %v270
          %338 = vst [vmem:[%s336 + $0x8] sm:$0xff] %v271
        $region40: #{tpu_custom_call.1} parent=31 // pred_fallthru
          _
        %p339 = scmp.eq.s32.totalorder %s23, 1
        %p340 = pnand %p339, %p259
        %p341 = pneg %p340
        // Predicated region
        $region41: #{tpu_custom_call.1} parent=31 // pred_check
          _
        $region42: #{tpu_custom_call.1} parent=31 // pred_check_branch
          %343 = sbr.rel (%p340) target = $region44
        $region43: #{tpu_custom_call.1} parent=31 // pred_region
          %v344 = vld [vmem:[#allocation2] sm:$0xf]
          %v345 = vmul.f32 %v344, 0.001953125
          %v346 = vld [vmem:[#allocation3] sm:$0xf]
          %v347 = vmul.f32 %v346, 0.001953125
          %v348 = vmul.f32 %v345, %v345
          %v349 = vsub.f32 %v347, %v348
          %v350 = vadd.f32 %v349, 1e-05
          %v351 = vrsqrt.pop %v350
          %v352 = vmul.f32 %v351, %v350
          %v353 = vmul.f32 %v352, %v351
          %v354 = vmul.f32 0.5, %v353
          %v355 = vsub.f32 1.5, %v354
          %v356 = vmul.f32 %v351, %v355
          %vm357 = vweird.f32 %v350
          %vm358 = vweird.f32 %v351
          %vm359 = vmor %vm357, %vm358
          %v360 = vsel %vm359, %v351, %v356
          %v361 = vld [vmem:[%s251] sm:$0xf]
          %v362 = vld [vmem:[%s251 + $0x4] sm:$0xf]
          %v363 = vmul.f32 %v361, %v360
          %v364 = vmul.f32 %v362, %v360
          %vm365 = vcmask 3072
          %366 = vst.msk [vmem:[#allocation4] sm:$0xf] %vm365, %v363
          %367 = vst.msk [vmem:[#allocation4 + $0x4] sm:$0xf] %vm365, %v364
          %v368 = vld [vmem:[%s255] sm:$0xf]
          %v369 = vld [vmem:[%s255 + $0x4] sm:$0xf]
          %v370 = vmul.f32 %v345, %v363
          %v371 = vmul.f32 %v345, %v364
          %v372 = vsub.f32 %v368, %v370
          %v373 = vsub.f32 %v369, %v371
          %374 = vst.msk [vmem:[#allocation5] sm:$0xf] %vm365, %v372
          %375 = vst.msk [vmem:[#allocation5 + $0x4] sm:$0xf] %vm365, %v373
        $region44: #{tpu_custom_call.1} parent=31 // pred_fallthru
          _
        // Predicated region
        $region45: #{tpu_custom_call.1} parent=31 // pred_check
          %p376 = pneg %p339
        $region46: #{tpu_custom_call.1} parent=31 // pred_check_branch
          %378 = sbr.rel (%p376) target = $region48
        $region47: #{tpu_custom_call.1} parent=31 // pred_region
          %s379 = smul.u32 %s24, 4
          %s380 = smul.addr %s379, 4
          %s381 = scalar_lea.vmem [#allocation6], %s380
          %v382 = vld [vmem:[%s381] sm:$0xff]
          %v383 = vld [vmem:[%s381 + $0x8] sm:$0xff]
          %v384 = vld [vmem:[#allocation4] sm:$0xf]
          %v385 = vld [vmem:[#allocation4 + $0x4] sm:$0xf]
          %387 = vset.pattern.permute.xlu0 0
          %388 = vperm.xlu0 %387, %v384
          %v389 = vpop.permute.xlu0 %388
          %391 = vset.pattern.permute.xlu0 0
          %392 = vperm.xlu0 %391, %v385
          %v393 = vpop.permute.xlu0 %392
          %v395 = vunpack.c.l.s4 839922192
          %v396 = vunpack.c.0.s8 %v395
          %v397 = vperm.slane %v389, %v396
          %v399 = vunpack.c.l.s4 839922192
          %v400 = vunpack.c.0.s8 %v399
          %v401 = vperm.slane %v393, %v400
          %v404 = vmul.f32 %v382, %v397
          %v405 = vmul.f32 %v383, %v401
          %v406 = vld [vmem:[#allocation5] sm:$0xf]
          %v407 = vld [vmem:[#allocation5 + $0x4] sm:$0xf]
          %409 = vset.pattern.permute.xlu0 0
          %410 = vperm.xlu0 %409, %v406
          %v411 = vpop.permute.xlu0 %410
          %413 = vset.pattern.permute.xlu0 0
          %414 = vperm.xlu0 %413, %v407
          %v415 = vpop.permute.xlu0 %414
          %v417 = vunpack.c.l.s4 839922192
          %v418 = vunpack.c.0.s8 %v417
          %v419 = vperm.slane %v411, %v418
          %v421 = vunpack.c.l.s4 839922192
          %v422 = vunpack.c.0.s8 %v421
          %v423 = vperm.slane %v415, %v422
          %v426 = vadd.f32 %v404, %v419
          %v427 = vadd.f32 %v405, %v423
          %428 = vst [vmem:[%s233] sm:$0xff] %v426
          %429 = vst [vmem:[%s233 + $0x8] sm:$0xff] %v427
        $region48: #{tpu_custom_call.1} parent=31 // pred_fallthru
          _
        %s430 = sand.u32 %s132, 1
        %s431 = scalar_lea.sflag [#allocation8], %s430
        %s432 = sand.u32 %s132, 1
        %s433 = smul.addr %s432, 16
        %s434 = scalar_lea.vmem [#allocation7], %s433
        // Predicated region
        $region49: #{tpu_custom_call.1} parent=31 // pred_check
          %p435 = pneg %p142
        $region50: #{tpu_custom_call.1} parent=31 // pred_check_branch
          %437 = sbr.rel (%p435) target = $region52
        $region51: #{tpu_custom_call.1} parent=31 // pred_region
          %s438 = smul.u32 %s24, %s23
          %s439 = smul.u32 2, %s438
          %441 = vsyncadd %s431, 0
          %s442 = smul.addr %s22, 2
          %s443 = sadd.s32 %s439, %s442
          %s444 = smul.addr %s443, 4
          %s445 = scalar_lea.hbm %s3, %s444
          %s446 = sshll.u32 %s434, 4
          %s447 = int_to_ptr.vmem [resolvable:$true] %s446
          %s448 = sshll.u32 %s445, 4
          %s449 = int_to_ptr.hbm [resolvable:$true] %s448
          %454 = dma.vmem_to_hbm [thread:$0]  %s447, 256, %s449, %s431, 128, 128, 8
        $region52: #{tpu_custom_call.1} parent=31 // pred_fallthru
          _
      $region32: #{tpu_custom_call.1} parent=5 // pred_fallthru
        _
      %p455 = scmp.le.s32.totalorder 2, %s12
      // Predicated region
      $region53: #{tpu_custom_call.1} parent=5 // pred_check
        %p456 = pneg %p455
      $region54: #{tpu_custom_call.1} parent=5 // pred_check_branch
        %458 = sbr.rel (%p456) target = $region56
      $region55: #{tpu_custom_call.1} parent=5 // pred_region
        %s459 = ssub.s32 %s12, 2
        // Predicated region
        $region57: #{tpu_custom_call.1} parent=55 // pred_check
          %p460 = pneg %p148
        $region58: #{tpu_custom_call.1} parent=55 // pred_check_branch
          %462 = sbr.rel (%p460) target = $region60
        $region59: #{tpu_custom_call.1} parent=55 // pred_region
          %s463 = sand.u32 %s133, 1
          %s464 = scalar_lea.sflag [#allocation8], %s463
          %s465 = sand.u32 %s133, 1
          %s466 = smul.addr %s465, 16
          %s467 = scalar_lea.vmem [#allocation7], %s466
          %469 = dma.done %s464, 256
        $region60: #{tpu_custom_call.1} parent=55 // pred_fallthru
          _
      $region56: #{tpu_custom_call.1} parent=5 // pred_fallthru
        _
    $region6: #{tpu_custom_call.1} parent=1 // loop_footer
      %s16 = sadd.s32 1, %s12
    $region7: #{tpu_custom_call.1} parent=1 // loop_footer_branch
      %11 = sbr.rel target = $region3
    $region8: #{tpu_custom_call.1} parent=1 // loop_exit
      _
    %470 = vsyncpa [#allocation8], 1
    %s471 = scalar_lea.sflag [#allocation8], 1
    %472 = vsyncpa %s471, 1

</llo_original>
